<compile_context>
chip_gen: v5e
topology: v5e:2x2
jax: 0.10.0
libtpu: 0.0.40
codegen_flags: <defaults>
</compile_context>

<pallas_src>
import functools
import math

import jax
import jax.numpy as jnp
from jax.experimental import pallas as pl
from jax.experimental.pallas import tpu as pltpu


# ---------------------------------------------------------------------------
# Helpers
# ---------------------------------------------------------------------------

def _round_up(a, b):
    return (a + b - 1) // b * b


def _pick_tile_m(m8, tm):
    """Largest multiple of 8 that divides m8 and is <= tm."""
    cap = min(tm, m8)
    best = 8
    d = 8
    while d <= cap:
        if m8 % d == 0:
            best = d
        d += 8
    return best


def _pick_tile_n(n_pad, tn):
    """n_pad itself if it fits, else largest multiple of 128 dividing n_pad."""
    if n_pad <= tn:
        return n_pad
    best = 128
    d = 128
    while d <= tn:
        if n_pad % d == 0:
            best = d
        d += 128
    return best


# ---------------------------------------------------------------------------
# Generic linear (+ optional ReLU + optional train-mode dropout) kernel.
# ---------------------------------------------------------------------------

def _linear_kernel(x_ref, w_ref, b_ref, o_ref, *, use_relu, dropout_r,
                   seed_mix, tm, tn, n_total, compute_dtype):
    # x_ref: (tm, K); w_ref: (tn, K) PyTorch (out, in) layout; b_ref: (1, tn).
    xv = x_ref[...]
    if compute_dtype is not None and xv.dtype != compute_dtype:
        xv = xv.astype(compute_dtype)
    wv = w_ref[...]
    # Contract over K (x @ W.T); Mosaic supports the transposed-RHS matmul
    # natively (equivalent to pl.dot(..., trans_b=True)) -- no in-kernel
    # weight transpose/relayout and no weight.T in the wrapper.
    y = jax.lax.dot_general(
        xv, wv,
        dimension_numbers=(((1,), (1,)), ((), ())),
        preferred_element_type=jnp.float32)
    y = y + b_ref[...].astype(jnp.float32)
    if use_relu:
        y = jnp.maximum(y, 0.0)
    if dropout_r > 0.0:
        # Deterministic counter-hash dropout (portable: TPU + interpret mode).
        j = pl.program_id(0)          # column (N) block index  -- outer axis
        i = pl.program_id(1)          # row    (M) block index  -- inner axis
        rows = jax.lax.broadcasted_iota(jnp.int32, y.shape, 0) + i * tm
        cols = jax.lax.broadcasted_iota(jnp.int32, y.shape, 1) + j * tn
        idx = (rows.astype(jnp.uint32) * jnp.uint32(n_total)
               + cols.astype(jnp.uint32))
        z = idx ^ jnp.uint32(seed_mix)
        # splitmix32-style finalizer (all VPU elementwise int ops).
        z = (z ^ (z >> 16)) * jnp.uint32(0x7FEB352D)
        z = (z ^ (z >> 15)) * jnp.uint32(0x846CA68B)
        z = z ^ (z >> 16)
        r31 = (z >> 1).astype(jnp.int32)                 # uniform in [0, 2^31)
        thresh = min(int(round(dropout_r * 2.0 ** 31)), 2 ** 31 - 1)
        keep = r31 >= jnp.int32(thresh)                  # keep prob = 1 - p
        y = jnp.where(keep, y * (1.0 / (1.0 - dropout_r)), 0.0)
    o_ref[...] = y.astype(o_ref.dtype)


def linear_forward(x2, weight, bias, *, use_relu=False, dropout_r=0.0,
                   training=False, seed=0, tm=512, tn=1024,
                   compute_dtype=None, out_dtype=None):
    """y = x2 @ weight.T + bias  (+ relu, + train-mode dropout).

    x2:     (M, K)  activations (feature axis last / lane axis)
    weight: (N, K)  PyTorch nn.Linear layout (never transposed in the wrapper)
    bias:   (N,)
    """
    M, K = x2.shape
    N = weight.shape[0]
    out_dtype = x2.dtype if out_dtype is None else out_dtype

    if compute_dtype is not None and weight.dtype != compute_dtype:
        weight = weight.astype(compute_dtype)   # one-time cast, halves W DMA
    bias = bias.astype(jnp.float32)

    # Row tiling: big tiles, picked as a divisor of round_up(M,8) so the
    # activation is (almost) never padded in the wrapper.
    m_pad = _round_up(M, 8)
    tm_eff = _pick_tile_m(m_pad, tm)

    # Output tiling: lane-dense stores; single column tile whenever possible.
    n_pad = _round_up(N, 128)
    tn_eff = _pick_tile_n(n_pad, tn)

    if m_pad != M:
        x2 = jnp.pad(x2, ((0, m_pad - M), (0, 0)))       # <= 7 rows
    if n_pad != N:
        weight = jnp.pad(weight, ((0, n_pad - N), (0, 0)))
        bias = jnp.pad(bias, (0, n_pad - N))
    bias2 = bias.reshape(1, n_pad)

    grid_m = m_pad // tm_eff
    grid_n = n_pad // tn_eff

    apply_dropout = (dropout_r > 0.0) and training
    seed_mix = ((int(seed) * 0x9E3779B9) + 0x85EBCA6B) & 0xFFFFFFFF
    kernel = functools.partial(
        _linear_kernel,
        use_relu=use_relu,
        dropout_r=float(dropout_r) if apply_dropout else 0.0,
        seed_mix=seed_mix, tm=tm_eff, tn=tn_eff, n_total=n_pad,
        compute_dtype=compute_dtype)

    # VMEM budget: double-buffered x / weight / bias / out tiles, 2x headroom,
    # capped at 48 MiB so v7x (64 MiB physical) keeps compiler headroom.
    est = 2 * (tm_eff * K * x2.dtype.itemsize
               + tn_eff * K * weight.dtype.itemsize
               + tn_eff * 4
               + tm_eff * tn_eff * jnp.dtype(out_dtype).itemsize)
    vmem_limit = int(min(max(32 * 2 ** 20, 2 * est), 48 * 2 ** 20))

    y = pl.pallas_call(
        kernel,
        out_shape=jax.ShapeDtypeStruct((m_pad, n_pad), out_dtype),
        grid_spec=pltpu.PrefetchScalarGridSpec(
            num_scalar_prefetch=0,
            # Column (weight) axis OUTER, row axis INNER: the weight block
            # stays resident across the whole row sweep (no re-DMA per row
            # tile); with tn cap 1024 grid_n is usually 1 anyway.
            grid=(grid_n, grid_m),
            in_specs=[
                pl.BlockSpec((tm_eff, K), lambda j, i: (i, 0)),
                pl.BlockSpec((tn_eff, K), lambda j, i: (j, 0)),
                pl.BlockSpec((1, tn_eff), lambda j, i: (0, j)),
            ],
            out_specs=pl.BlockSpec((tm_eff, tn_eff), lambda j, i: (i, j)),
        ),
        compiler_params=pltpu.CompilerParams(
            dimension_semantics=("parallel", "parallel"),
            vmem_limit_bytes=vmem_limit,
        ),
    )(x2, weight, bias2)

    if m_pad != M or n_pad != N:
        y = y[:M, :N]
    return y


# ---------------------------------------------------------------------------
# Fused glimpse kernel (batched over TB batch elements per grid step):
#   att = h @ W1.T + b1, masked_fill(-1e9), softmax over S,
#   pooled[b, g, :] = sum_s att[g, b, s] * x[b, s, :]
# ---------------------------------------------------------------------------

def _attflat_pool_kernel(h_ref, x_ref, mask_ref, w1_ref, b1_ref, o_ref):
    h = h_ref[...]                       # (TB, S, mid)   bf16 or f32
    xb = x_ref[...]                      # (TB, S, H)     f32
    m = mask_ref[...][:, 0, :]           # (TB, S)        1.0 where masked (pad)
    w1 = w1_ref[...]                     # (G, mid)       same dtype as h
    b1 = b1_ref[...]                     # (G, 1)         f32

    # Logits laid out (G, TB, S): S sits on the lane axis -> cheap softmax.
    att = jnp.einsum('gm,bsm->gbs', w1, h,
                     preferred_element_type=jnp.float32)
    att = att + b1[:, :, None]
    att = jnp.where(m[None, :, :] > 0.5, -1000000000.0, att)   # masked_fill
    att = att - jnp.max(att, axis=-1, keepdims=True)            # softmax over S
    e = jnp.exp(att)
    att = e / jnp.sum(e, axis=-1, keepdims=True)

    pooled = jnp.einsum('gbs,bsh->bgh', att.astype(xb.dtype), xb,
                        preferred_element_type=jnp.float32)     # (TB, G, H)
    o_ref[...] = pooled.reshape(o_ref.shape).astype(o_ref.dtype)


def _attflat_pool(h, x, mask_f, w1, b1_col):
    B, S, mid = h.shape
    H = x.shape[-1]
    G = w1.shape[0]

    # Batch several elements per grid step to amortize the ~0.35us/step
    # overhead and make the output block 8-sublane dense.
    TB = 8 if (B % 8 == 0) else B

    est = 2 * (TB * S * mid * h.dtype.itemsize
               + TB * S * H * x.dtype.itemsize
               + TB * S * 4
               + TB * G * H * 4) + (G * mid + G) * 4
    vmem_limit = int(min(max(32 * 2 ** 20, 2 * est), 48 * 2 ** 20))

    out = pl.pallas_call(
        _attflat_pool_kernel,
        out_shape=jax.ShapeDtypeStruct((B, G * H), jnp.float32),
        grid_spec=pltpu.PrefetchScalarGridSpec(
            num_scalar_prefetch=0,
            grid=(B // TB,),
            in_specs=[
                pl.BlockSpec((TB, S, mid), lambda b: (b, 0, 0)),
                pl.BlockSpec((TB, S, H), lambda b: (b, 0, 0)),
                pl.BlockSpec((TB, 1, S), lambda b: (b, 0, 0)),
                pl.BlockSpec((G, mid), lambda b: (0, 0)),
                pl.BlockSpec((G, 1), lambda b: (0, 0)),
            ],
            out_specs=pl.BlockSpec((TB, G * H), lambda b: (b, 0)),
        ),
        compiler_params=pltpu.CompilerParams(
            dimension_semantics=("parallel",),
            vmem_limit_bytes=vmem_limit,
        ),
    )(h, x, mask_f, w1, b1_col)
    return out                                   # (B, G*H) f32


# ---------------------------------------------------------------------------
# AttFlat forward.
# ---------------------------------------------------------------------------

def attflat_forward(x, x_mask, w0, b0, w1, b1, w_merge, b_merge, *,
                    dropout_r=0.0, training=False, seed=0,
                    use_bf16=True, tm=512, tn=1024):
    """AttFlat.forward.

    x:       (B, S, HIDDEN) float32
    x_mask:  boolean, any shape with B*S elements (e.g. (B,1,1,S)); True = pad
    w0,b0:   MLP.fc.linear params        (FLAT_MLP, HIDDEN), (FLAT_MLP,)
    w1,b1:   MLP.linear params           (GLIMPSES, FLAT_MLP), (GLIMPSES,)
    w_merge,b_merge: linear_merge params (FLAT_OUT, HIDDEN*GLIMPSES), (FLAT_OUT,)
    use_bf16: bf16 matmul operands + bf16 h intermediate (f32 accumulation).
    """
    B, S, H = x.shape
    mid = w0.shape[0]
    G = w1.shape[0]

    compute_dtype = jnp.bfloat16 if use_bf16 else None
    h_dtype = jnp.bfloat16 if use_bf16 else x.dtype

    # 1) MLP.fc : linear + relu + (train-mode) dropout, rows = B*S.
    #    h is the largest HBM round trip -> stored in bf16 on the fast path.
    h = linear_forward(x.reshape(B * S, H), w0, b0, use_relu=True,
                       dropout_r=dropout_r, training=training, seed=seed,
                       tm=tm, tn=tn, compute_dtype=compute_dtype,
                       out_dtype=h_dtype)
    h = h.reshape(B, S, mid)

    # 2) fused glimpse projection + masked softmax + attention pooling.
    mask_f = x_mask.reshape(B, 1, S).astype(jnp.float32)
    pooled = _attflat_pool(h, x, mask_f, w1.astype(h_dtype),
                           b1.reshape(G, 1).astype(jnp.float32))   # (B, G*H)

    # 3) linear_merge.
    out = linear_forward(pooled, w_merge, b_merge, use_relu=False,
                         dropout_r=0.0, training=False, seed=seed,
                         tm=tm, tn=tn, compute_dtype=compute_dtype,
                         out_dtype=x.dtype)
    return out


# ---------------------------------------------------------------------------
# Pure-JAX reference (eval mode) and parameter init mimicking nn.Linear.
# ---------------------------------------------------------------------------

def attflat_reference(x, x_mask, w0, b0, w1, b1, wm, bm):
    hp = jax.lax.Precision.HIGHEST
    B, S, H = x.shape
    G = w1.shape[0]
    h = jnp.maximum(jnp.einsum('bsk,mk->bsm', x, w0, precision=hp) + b0, 0.0)
    att = jnp.einsum('bsm,gm->bsg', h, w1, precision=hp) + b1
    mask = x_mask.reshape(B, S)
    att = jnp.where(mask[:, :, None], -1000000000.0, att)
    att = jax.nn.softmax(att, axis=1)
    pooled = jnp.einsum('bsg,bsh->bgh', att, x, precision=hp).reshape(B, G * H)
    return jnp.einsum('bk,nk->bn', pooled, wm, precision=hp) + bm


def _init_linear_params(key, in_size, out_size):
    kw, kb = jax.random.split(key)
    bound = 1.0 / math.sqrt(in_size)
    w = jax.random.uniform(kw, (out_size, in_size), jnp.float32,
                           minval=-bound, maxval=bound)
    b = jax.random.uniform(kb, (out_size,), jnp.float32,
                           minval=-bound, maxval=bound)
    return w, b


if __name__ == "__main__":
    key = jax.random.PRNGKey(0)
    kx, k0, k1, km = jax.random.split(key, 4)

    # Small, lane-friendly AttFlat config (2 glimpses exercises the concat).
    B, S = 2, 16
    HIDDEN_SIZE, FLAT_MLP_SIZE = 128, 256
    FLAT_GLIMPSES, FLAT_OUT_SIZE = 2, 256
    DROPOUT_R = 0.1

    x = jax.random.normal(kx, (B, S, HIDDEN_SIZE), jnp.float32)
    lens = jnp.array([S, S - 5], jnp.int32)
    x_mask = (jnp.arange(S)[None, :] >= lens[:, None]).reshape(B, 1, 1, S)

    w0, b0 = _init_linear_params(k0, HIDDEN_SIZE, FLAT_MLP_SIZE)
    w1, b1 = _init_linear_params(k1, FLAT_MLP_SIZE, FLAT_GLIMPSES)
    wm, bm = _init_linear_params(km, HIDDEN_SIZE * FLAT_GLIMPSES, FLAT_OUT_SIZE)

    ref = attflat_reference(x, x_mask, w0, b0, w1, b1, wm, bm)

    # 1) Pure-f32 path, stricter check against the HIGHEST-precision reference.
    out_f32 = attflat_forward(x, x_mask, w0, b0, w1, b1, wm, bm,
                              dropout_r=DROPOUT_R, training=False,
                              use_bf16=False)
    out_f32 = jax.block_until_ready(out_f32)
    assert out_f32.shape == (B, FLAT_OUT_SIZE)
    err32 = float(jnp.max(jnp.abs(out_f32 - ref)))
    assert jnp.allclose(out_f32, ref, atol=2e-2, rtol=2e-2), err32

    # 2) Default fast path: bf16 operands + bf16 h intermediate (f32 accum).
    out_bf = attflat_forward(x, x_mask, w0, b0, w1, b1, wm, bm,
                             dropout_r=DROPOUT_R, training=False)
    out_bf = jax.block_until_ready(out_bf)
    errbf = float(jnp.max(jnp.abs(out_bf - ref)))
    assert jnp.allclose(out_bf, ref, atol=8e-2, rtol=8e-2), errbf

    # 3) Training-mode dropout path (portable counter-hash Bernoulli mask).
    out_tr = attflat_forward(x, x_mask, w0, b0, w1, b1, wm, bm,
                             dropout_r=DROPOUT_R, training=True, seed=1234)
    out_tr = jax.block_until_ready(out_tr)
    assert out_tr.shape == (B, FLAT_OUT_SIZE)
    assert bool(jnp.all(jnp.isfinite(out_tr)))

    print("KERNEL_OK")
</pallas_src>

<mosaic_0001>
module attributes {stable_mosaic.version = 11 : i64} {
  func.func @_linear_kernel(%arg0: i32, %arg1: i32, %arg2: memref<32x128xf32, #tpu.memory_space<vmem>>, %arg3: memref<256x128xf32, #tpu.memory_space<vmem>>, %arg4: memref<1x256xf32, #tpu.memory_space<vmem>>, %arg5: memref<32x256xf32, #tpu.memory_space<vmem>>) attributes {dimension_semantics = [#tpu.dimension_semantics<parallel>, #tpu.dimension_semantics<parallel>], iteration_bounds = array<i64: 1, 1>, scalar_prefetch = 0 : i64, scratch_operands = 0 : i64, tpu.core_type = #tpu.core_type<tc>, window_params = [{transform_indices = @transform_0, window_bounds = array<i64: 32, 128>}, {transform_indices = @transform_1, window_bounds = array<i64: 256, 128>}, {transform_indices = @transform_2, window_bounds = array<i64: 1, 256>}, {transform_indices = @transform_3, window_bounds = array<i64: 32, 256>}]} {
    %c0 = arith.constant 0 : index
    %c0_0 = arith.constant 0 : index
    %0 = vector.load %arg2[%c0, %c0_0] : memref<32x128xf32, #tpu.memory_space<vmem>>, vector<32x128xf32>
    %c0_1 = arith.constant 0 : index
    %c0_2 = arith.constant 0 : index
    %1 = vector.load %arg3[%c0_1, %c0_2] : memref<256x128xf32, #tpu.memory_space<vmem>>, vector<256x128xf32>
    %cst = arith.constant dense<0.000000e+00> : vector<32x256xf32>
    %2 = tpu.matmul %0, %1, %cst {dimension_numbers = #tpu.dot_dimension_numbers<[1], [1], [0], [0], [0, 0, 1, 0], [], []>} : vector<32x128xf32>, vector<256x128xf32>, vector<32x256xf32> -> vector<32x256xf32>
    %c0_3 = arith.constant 0 : index
    %c0_4 = arith.constant 0 : index
    %3 = vector.load %arg4[%c0_3, %c0_4] : memref<1x256xf32, #tpu.memory_space<vmem>>, vector<1x256xf32>
    %4 = vector.broadcast %3 : vector<1x256xf32> to vector<32x256xf32>
    %5 = arith.addf %2, %4 : vector<32x256xf32>
    %cst_5 = arith.constant 0.000000e+00 : f32
    %6 = vector.broadcast %cst_5 : f32 to vector<32x256xf32>
    %7 = arith.maximumf %5, %6 : vector<32x256xf32>
    %c0_6 = arith.constant 0 : index
    %c0_7 = arith.constant 0 : index
    %8 = vector.load %arg5[%c0_6, %c0_7] : memref<32x256xf32, #tpu.memory_space<vmem>>, vector<32x256xf32>
    tpu.vector_store %arg5[%c0_6, %c0_7], %7 {strides = array<i32>} : memref<32x256xf32, #tpu.memory_space<vmem>>, vector<32x256xf32>,
    return
  }
  func.func @transform_0(%arg0: i32, %arg1: i32) -> (i32, i32) {
    %c0_i32 = arith.constant 0 : i32
    %c0_i32_0 = arith.constant 0 : i32
    return %arg1, %c0_i32 : i32, i32
  }
  func.func @transform_1(%arg0: i32, %arg1: i32) -> (i32, i32) {
    %c0_i32 = arith.constant 0 : i32
    %c0_i32_0 = arith.constant 0 : i32
    return %arg0, %c0_i32 : i32, i32
  }
  func.func @transform_2(%arg0: i32, %arg1: i32) -> (i32, i32) {
    %c0_i32 = arith.constant 0 : i32
    %c0_i32_0 = arith.constant 0 : i32
    return %c0_i32, %arg0 : i32, i32
  }
  func.func @transform_3(%arg0: i32, %arg1: i32) -> (i32, i32) {
    %c0_i32 = arith.constant 0 : i32
    return %arg1, %arg0 : i32, i32
  }
}

</mosaic_0001>

<llo_original>
// kernel: tpu_custom_call.1
$region0: #{tpu_custom_call.1}
  #allocation0 [shape = 'u32[]', space=smem, size = 0x4, offset = 0x4, fixed_abs, tag = 'smem constant byte address 0x4 - core index']
  #allocation1 [shape = 'u32[72,128]{1,0:T(1,128)}', space=vmem, size = 0x9000, scoped, tag = 'internal scratch']
  %s0 = inlined_call_operand.hbm [shape: f32[32,128], index: 0, kind: input, shape index: {}]
  %s1 = inlined_call_operand.hbm [shape: f32[256,128], index: 1, kind: input, shape index: {}]
  %s2 = inlined_call_operand.hbm [shape: f32[1,256], index: 2, kind: input, shape index: {}]
  %s3 = inlined_call_operand.hbm [shape: f32[32,256], index: 3, kind: output, shape index: {}]
  %s4 = sld [smem:[#allocation0]]
  $region34: #{tpu_custom_call.1} parent=0
    _
  %s6 = ssub.s32 1, %s4
  %s7 = scalar_select 0, %s6, %s4
  $region1: #{tpu_custom_call.1} parent=0
    #allocation2 [shape = 'u8[16384]{0}', space=vmem, size = 0x4000, scoped, tag = 'input window, operand 0, single buffered']
    #allocation3 [shape = 's32[1]{0}', space=sflag, size = 0x4, scoped, tag = 'scoped memory for tpu_custom_call.1']
    #allocation4 [shape = 's32[1]{0}', space=sflag, size = 0x4, scoped, tag = 'scoped memory for tpu_custom_call.1']
    #allocation5 [shape = 'u8[131072]{0}', space=vmem, size = 0x20000, scoped, tag = 'input window, operand 1, single buffered']
    #allocation6 [shape = 's32[1]{0}', space=sflag, size = 0x4, scoped, tag = 'scoped memory for tpu_custom_call.1']
    #allocation7 [shape = 'u8[1024]{0}', space=vmem, size = 0x400, scoped, tag = 'input window, operand 2, single buffered']
    #allocation8 [shape = 'u8[32768]{0}', space=vmem, size = 0x8000, scoped, tag = 'output window, operand 0, single buffered']
    %8 = vsyncpa [#allocation3], 0
    %9 = vsyncpa [#allocation6], 0
    %10 = vsyncpa [#allocation4], 0
    // Predicated region
    $region2: #{tpu_custom_call.1} parent=1 // pred_check
      _
    $region3: #{tpu_custom_call.1} parent=1 // pred_check_branch
      %12 = sbr.rel (0) target = $region5
    $region4: #{tpu_custom_call.1} parent=1 // pred_region
      %14 = vsyncadd [#allocation3], 0
      %s15 = sshll.u32 %s0, 4
      %s16 = int_to_ptr.hbm [resolvable:$true] %s15
      %s17 = sshll.u32 [#allocation2], 4
      %s18 = int_to_ptr.vmem [resolvable:$true] %s17
      %23 = dma.hbm_to_vmem [thread:$0]  %s16, 512, %s18, [#allocation3], 128, 128, 8
    $region5: #{tpu_custom_call.1} parent=1 // pred_fallthru
      _
    // Predicated region
    $region6: #{tpu_custom_call.1} parent=1 // pred_check
      _
    $region7: #{tpu_custom_call.1} parent=1 // pred_check_branch
      %25 = sbr.rel (0) target = $region9
    $region8: #{tpu_custom_call.1} parent=1 // pred_region
      %27 = vsyncadd [#allocation6], 0
      %s28 = sshll.u32 %s1, 4
      %s29 = int_to_ptr.hbm [resolvable:$true] %s28
      %s30 = sshll.u32 [#allocation5], 4
      %s31 = int_to_ptr.vmem [resolvable:$true] %s30
      %36 = dma.hbm_to_vmem [thread:$0]  %s29, 4096, %s31, [#allocation6], 128, 128, 8
    $region9: #{tpu_custom_call.1} parent=1 // pred_fallthru
      _
    // Predicated region
    $region10: #{tpu_custom_call.1} parent=1 // pred_check
      _
    $region11: #{tpu_custom_call.1} parent=1 // pred_check_branch
      %38 = sbr.rel (0) target = $region13
    $region12: #{tpu_custom_call.1} parent=1 // pred_region
      %40 = vsyncadd [#allocation6], 0
      %s42 = sshll.u32 %s2, 4
      %s43 = int_to_ptr.hbm [resolvable:$true] %s42
      %s44 = sshll.u32 [#allocation7], 4
      %s45 = int_to_ptr.vmem [resolvable:$true] %s44
      %47 = dma.hbm_to_vmem [thread:$0]  %s43, 32, %s45, [#allocation6]
    $region13: #{tpu_custom_call.1} parent=1 // pred_fallthru
      _
    // Predicated region
    $region14: #{tpu_custom_call.1} parent=1 // pred_check
      _
    $region15: #{tpu_custom_call.1} parent=1 // pred_check_branch
      %49 = sbr.rel (0) target = $region17
    $region16: #{tpu_custom_call.1} parent=1 // pred_region
      %51 = dma.done [#allocation3], 512
    $region17: #{tpu_custom_call.1} parent=1 // pred_fallthru
      _
    // Predicated region
    $region18: #{tpu_custom_call.1} parent=1 // pred_check
      _
    $region19: #{tpu_custom_call.1} parent=1 // pred_check_branch
      %53 = sbr.rel (0) target = $region21
    $region20: #{tpu_custom_call.1} parent=1 // pred_region
      %55 = dma.done [#allocation6], 4096
    $region21: #{tpu_custom_call.1} parent=1 // pred_fallthru
      _
    // Predicated region
    $region22: #{tpu_custom_call.1} parent=1 // pred_check
      _
    $region23: #{tpu_custom_call.1} parent=1 // pred_check_branch
      %57 = sbr.rel (0) target = $region25
    $region24: #{tpu_custom_call.1} parent=1 // pred_region
      %59 = dma.done [#allocation6], 32
    $region25: #{tpu_custom_call.1} parent=1 // pred_fallthru
      _
    %v60 = vld [vmem:[#allocation2] sm:$0xff]
    %v61 = vld [vmem:[#allocation2 + $0x8] sm:$0xff]
    %v62 = vld [vmem:[#allocation2 + $0x10] sm:$0xff]
    %v63 = vld [vmem:[#allocation2 + $0x18] sm:$0xff]
    %v64 = vld [vmem:[#allocation5] sm:$0xff]
    %v65 = vld [vmem:[#allocation5 + $0x8] sm:$0xff]
    %v66 = vld [vmem:[#allocation5 + $0x10] sm:$0xff]
    %v67 = vld [vmem:[#allocation5 + $0x18] sm:$0xff]
    %v68 = vld [vmem:[#allocation5 + $0x20] sm:$0xff]
    %v69 = vld [vmem:[#allocation5 + $0x28] sm:$0xff]
    %v70 = vld [vmem:[#allocation5 + $0x30] sm:$0xff]
    %v71 = vld [vmem:[#allocation5 + $0x38] sm:$0xff]
    %v72 = vld [vmem:[#allocation5 + $0x40] sm:$0xff]
    %v73 = vld [vmem:[#allocation5 + $0x48] sm:$0xff]
    %v74 = vld [vmem:[#allocation5 + $0x50] sm:$0xff]
    %v75 = vld [vmem:[#allocation5 + $0x58] sm:$0xff]
    %v76 = vld [vmem:[#allocation5 + $0x60] sm:$0xff]
    %v77 = vld [vmem:[#allocation5 + $0x68] sm:$0xff]
    %v78 = vld [vmem:[#allocation5 + $0x70] sm:$0xff]
    %v79 = vld [vmem:[#allocation5 + $0x78] sm:$0xff]
    %v80 = vld [vmem:[#allocation5 + $0x80] sm:$0xff]
    %v81 = vld [vmem:[#allocation5 + $0x88] sm:$0xff]
    %v82 = vld [vmem:[#allocation5 + $0x90] sm:$0xff]
    %v83 = vld [vmem:[#allocation5 + $0x98] sm:$0xff]
    %v84 = vld [vmem:[#allocation5 + $0xa0] sm:$0xff]
    %v85 = vld [vmem:[#allocation5 + $0xa8] sm:$0xff]
    %v86 = vld [vmem:[#allocation5 + $0xb0] sm:$0xff]
    %v87 = vld [vmem:[#allocation5 + $0xb8] sm:$0xff]
    %v88 = vld [vmem:[#allocation5 + $0xc0] sm:$0xff]
    %v89 = vld [vmem:[#allocation5 + $0xc8] sm:$0xff]
    %v90 = vld [vmem:[#allocation5 + $0xd0] sm:$0xff]
    %v91 = vld [vmem:[#allocation5 + $0xd8] sm:$0xff]
    %v92 = vld [vmem:[#allocation5 + $0xe0] sm:$0xff]
    %v93 = vld [vmem:[#allocation5 + $0xe8] sm:$0xff]
    %v94 = vld [vmem:[#allocation5 + $0xf0] sm:$0xff]
    %v95 = vld [vmem:[#allocation5 + $0xf8] sm:$0xff]
    %v96 = vld [vmem:[#allocation7] sm:$0x3]
    %v98 = vperm.slane %v96, 0
    %v99 = vperm.slane %v96, 1
    %102 = vmatpush.xpose.msra.mxu0 %v79
    %103 = vmatpush.xpose.msra.mxu0 %v78
    %104 = vmatpush.xpose.msra.mxu0 %v77
    %105 = vmatpush.xpose.msra.mxu0 %v76
    %106 = vmatpush.xpose.msra.mxu0 %v75
    %107 = vmatpush.xpose.msra.mxu0 %v74
    %108 = vmatpush.xpose.msra.mxu0 %v73
    %109 = vmatpush.xpose.msra.mxu0 %v72
    %110 = vmatpush.xpose.msra.mxu0 %v71
    %111 = vmatpush.xpose.msra.mxu0 %v70
    %112 = vmatpush.xpose.msra.mxu0 %v69
    %113 = vmatpush.xpose.msra.mxu0 %v68
    %114 = vmatpush.xpose.msra.mxu0 %v67
    %115 = vmatpush.xpose.msra.mxu0 %v66
    %116 = vmatpush.xpose.msra.mxu0 %v65
    %117 = vmatpush.xpose.msra.mxu0 %v64
    %118 = vmatmul.f32.gmra.mxu0 %v60
    %v119 = vpop.f32.mrf.mxu0
    %v120 = vadd.f32 %v98, %v119
    %121 = vmatmul.f32.gmra.mxu0 %v61
    %v122 = vpop.f32.mrf.mxu0
    %v123 = vadd.f32 %v98, %v122
    %124 = vmatmul.f32.gmra.mxu0 %v62
    %v125 = vpop.f32.mrf.mxu0
    %v126 = vadd.f32 %v98, %v125
    %127 = vmatmul.f32.gmra.mxu0 %v63
    %v128 = vpop.f32.mrf.mxu0
    %v129 = vadd.f32 %v98, %v128
    %130 = vdwg.mxu0
    %131 = vmatpush.xpose.msra.mxu0 %v95
    %132 = vmatpush.xpose.msra.mxu0 %v94
    %133 = vmatpush.xpose.msra.mxu0 %v93
    %134 = vmatpush.xpose.msra.mxu0 %v92
    %135 = vmatpush.xpose.msra.mxu0 %v91
    %136 = vmatpush.xpose.msra.mxu0 %v90
    %137 = vmatpush.xpose.msra.mxu0 %v89
    %138 = vmatpush.xpose.msra.mxu0 %v88
    %139 = vmatpush.xpose.msra.mxu0 %v87
    %140 = vmatpush.xpose.msra.mxu0 %v86
    %141 = vmatpush.xpose.msra.mxu0 %v85
    %142 = vmatpush.xpose.msra.mxu0 %v84
    %143 = vmatpush.xpose.msra.mxu0 %v83
    %144 = vmatpush.xpose.msra.mxu0 %v82
    %145 = vmatpush.xpose.msra.mxu0 %v81
    %146 = vmatpush.xpose.msra.mxu0 %v80
    %147 = vmatmul.f32.gmra.mxu0 %v60
    %v148 = vpop.f32.mrf.mxu0
    %v149 = vadd.f32 %v99, %v148
    %150 = vmatmul.f32.gmra.mxu0 %v61
    %v151 = vpop.f32.mrf.mxu0
    %v152 = vadd.f32 %v99, %v151
    %153 = vmatmul.f32.gmra.mxu0 %v62
    %v154 = vpop.f32.mrf.mxu0
    %v155 = vadd.f32 %v99, %v154
    %156 = vmatmul.f32.gmra.mxu0 %v63
    %v157 = vpop.f32.mrf.mxu0
    %v158 = vadd.f32 %v99, %v157
    %159 = vdwg.mxu0
    %v160 = vmax.f32 %v120, 0.0
    %v161 = vmax.f32 %v149, 0.0
    %v162 = vmax.f32 %v123, 0.0
    %v163 = vmax.f32 %v152, 0.0
    %v164 = vmax.f32 %v126, 0.0
    %v165 = vmax.f32 %v155, 0.0
    %v166 = vmax.f32 %v129, 0.0
    %v167 = vmax.f32 %v158, 0.0
    %168 = vst [vmem:[#allocation8] sm:$0xff] %v160
    %169 = vst [vmem:[#allocation8 + $0x8] sm:$0xff] %v161
    %170 = vst [vmem:[#allocation8 + $0x10] sm:$0xff] %v162
    %171 = vst [vmem:[#allocation8 + $0x18] sm:$0xff] %v163
    %172 = vst [vmem:[#allocation8 + $0x20] sm:$0xff] %v164
    %173 = vst [vmem:[#allocation8 + $0x28] sm:$0xff] %v165
    %174 = vst [vmem:[#allocation8 + $0x30] sm:$0xff] %v166
    %175 = vst [vmem:[#allocation8 + $0x38] sm:$0xff] %v167
    // Predicated region
    $region26: #{tpu_custom_call.1} parent=1 // pred_check
      _
    $region27: #{tpu_custom_call.1} parent=1 // pred_check_branch
      %177 = sbr.rel (0) target = $region29
    $region28: #{tpu_custom_call.1} parent=1 // pred_region
      %179 = vsyncadd [#allocation4], 0
      %s180 = sshll.u32 [#allocation8], 4
      %s181 = int_to_ptr.vmem [resolvable:$true] %s180
      %s182 = sshll.u32 %s3, 4
      %s183 = int_to_ptr.hbm [resolvable:$true] %s182
      %188 = dma.vmem_to_hbm [thread:$0]  %s181, 1024, %s183, [#allocation4], 256, 256, 16
    $region29: #{tpu_custom_call.1} parent=1 // pred_fallthru
      _
    // Predicated region
    $region30: #{tpu_custom_call.1} parent=1 // pred_check
      _
    $region31: #{tpu_custom_call.1} parent=1 // pred_check_branch
      %190 = sbr.rel (0) target = $region33
    $region32: #{tpu_custom_call.1} parent=1 // pred_region
      %192 = dma.done [#allocation4], 1024
    $region33: #{tpu_custom_call.1} parent=1 // pred_fallthru
      _
    %193 = vsyncpa [#allocation3], 1
    %194 = vsyncpa [#allocation6], 1
    %195 = vsyncpa [#allocation4], 1

</llo_original>
